<compile_context>
chip_gen: v7x
topology: tpu7x:2x2x1
jax: 0.10.0
libtpu: 0.0.40
codegen_flags: <defaults>
</compile_context>

<pallas_src>
import functools

import jax
import jax.numpy as jnp
from jax.experimental import pallas as pl
from jax.experimental.pallas import tpu as pltpu


def _weighted_count_loss_kernel(pred_ref, gt_ref, out_ref, *, alpha, n_valid,
                                reduction):
    pred = pred_ref[...]          # (1, B) f32
    gt = gt_ref[...]              # (1, B) f32

    # Unnormalized weights on the EUP; squared error on the VPU.
    w = jnp.exp(jnp.float32(alpha) * gt)
    d = pred - gt                 # hoisted sub -> single VPU op
    wse = w * (d * d)

    # Two independent reductions over exactly B logical elements.
    s_w = jnp.sum(w)
    s_wse = jnp.sum(wse)

    # normalized weights = w * n_valid / s_w, hence the closed forms below.
    if reduction == 'mean':
        out_ref[0] = s_wse / s_w
    elif reduction == 'sum':
        out_ref[0] = jnp.float32(n_valid) * s_wse / s_w
    else:  # 'none' -> full (1, B) slab; exact divide (off the critical path)
        out_ref[...] = wse * (jnp.float32(n_valid) / s_w)


def weighted_count_loss(pred_count, gt_count, *, alpha=0.1, reduction='mean'):
    """JAX/Pallas equivalent of WeightedCountLoss.forward.

    Args:
        pred_count: (B,) float array.
        gt_count:   (B,) float array.
    Returns:
        scalar () for reduction in {'mean','sum'}, or (B,) for 'none'.
    """
    assert pred_count.shape == gt_count.shape and pred_count.ndim == 1
    assert reduction in ('mean', 'sum', 'none')
    b = pred_count.shape[0]

    # (B,) -> (1, B): metadata-only reshape, no padding, no extra HBM slab.
    pred2d = pred_count.astype(jnp.float32).reshape(1, b)
    gt2d = gt_count.astype(jnp.float32).reshape(1, b)

    kernel = functools.partial(_weighted_count_loss_kernel, alpha=float(alpha),
                               n_valid=b, reduction=reduction)

    cost = pl.CostEstimate(flops=6 * b, transcendentals=b,
                           bytes_accessed=3 * b * 4)

    if reduction in ('mean', 'sum'):
        out = pl.pallas_call(
            kernel,
            out_shape=jax.ShapeDtypeStruct((1,), jnp.float32),
            out_specs=pl.BlockSpec(memory_space=pltpu.MemorySpace.SMEM),
            cost_estimate=cost,
        )(pred2d, gt2d)
        return out[0]

    out = pl.pallas_call(
        kernel,
        out_shape=jax.ShapeDtypeStruct((1, b), jnp.float32),
        cost_estimate=cost,
    )(pred2d, gt2d)
    return out.reshape(b)


def _reference(pred_count, gt_count, alpha=0.1, reduction='mean'):
    weights = jnp.exp(alpha * gt_count)
    weights = weights / weights.mean()
    wse = weights * (pred_count - gt_count) ** 2
    if reduction == 'mean':
        return wse.mean()
    if reduction == 'sum':
        return wse.sum()
    return wse


if __name__ == "__main__":
    key = jax.random.PRNGKey(0)
    k1, k2 = jax.random.split(key)
    B = 8
    # Simulated crowd counts (non-negative).
    gt_count = jax.random.uniform(k1, (B,), jnp.float32, minval=0.0, maxval=50.0)
    pred_count = gt_count + jax.random.normal(k2, (B,), jnp.float32) * 3.0

    out_mean = jax.block_until_ready(
        weighted_count_loss(pred_count, gt_count, alpha=0.1, reduction='mean'))
    out_sum = jax.block_until_ready(
        weighted_count_loss(pred_count, gt_count, alpha=0.1, reduction='sum'))
    out_none = jax.block_until_ready(
        weighted_count_loss(pred_count, gt_count, alpha=0.1, reduction='none'))

    ref_mean = _reference(pred_count, gt_count, 0.1, 'mean')
    ref_sum = _reference(pred_count, gt_count, 0.1, 'sum')
    ref_none = _reference(pred_count, gt_count, 0.1, 'none')

    assert jnp.allclose(out_mean, ref_mean, rtol=1e-5, atol=1e-3)
    assert jnp.allclose(out_sum, ref_sum, rtol=1e-5, atol=1e-3)
    # Exact divide in the 'none' path -> tight tolerance again.
    assert jnp.allclose(out_none, ref_none, rtol=1e-5, atol=1e-3)

    print("KERNEL_OK")
</pallas_src>

<mosaic_0001>
module attributes {stable_mosaic.version = 11 : i64} {
  func.func @_weighted_count_loss_kernel(%arg0: memref<1x8xf32, #tpu.memory_space<vmem>>, %arg1: memref<1x8xf32, #tpu.memory_space<vmem>>, %arg2: memref<1xf32, #tpu.memory_space<smem>>) attributes {dimension_semantics = [], scalar_prefetch = 0 : i64, scratch_operands = 0 : i64, tpu.core_type = #tpu.core_type<tc>} {
    %c0 = arith.constant 0 : index
    %c0_0 = arith.constant 0 : index
    %0 = vector.load %arg0[%c0, %c0_0] : memref<1x8xf32, #tpu.memory_space<vmem>>, vector<1x8xf32>
    %c0_1 = arith.constant 0 : index
    %c0_2 = arith.constant 0 : index
    %1 = vector.load %arg1[%c0_1, %c0_2] : memref<1x8xf32, #tpu.memory_space<vmem>>, vector<1x8xf32>
    %cst = arith.constant 1.000000e-01 : f32
    %2 = vector.broadcast %cst : f32 to vector<1x8xf32>
    %3 = arith.mulf %2, %1 : vector<1x8xf32>
    %4 = math.exp %3 : vector<1x8xf32>
    %5 = arith.subf %0, %1 : vector<1x8xf32>
    %6 = arith.mulf %5, %5 : vector<1x8xf32>
    %7 = arith.mulf %4, %6 : vector<1x8xf32>
    %8 = vector.shape_cast %4 : vector<1x8xf32> to vector<1x1x8xf32>
    %cst_3 = arith.constant dense<0.000000e+00> : vector<1xf32>
    %9 = vector.multi_reduction <add>, %8, %cst_3 [1, 2] : vector<1x1x8xf32> to vector<1xf32>
    %10 = vector.shape_cast %9 : vector<1xf32> to vector<1x1x1xf32>
    %11 = vector.extract %10[0, 0, 0] : f32 from vector<1x1x1xf32>
    %12 = vector.shape_cast %7 : vector<1x8xf32> to vector<1x1x8xf32>
    %cst_4 = arith.constant dense<0.000000e+00> : vector<1xf32>
    %13 = vector.multi_reduction <add>, %12, %cst_4 [1, 2] : vector<1x1x8xf32> to vector<1xf32>
    %14 = vector.shape_cast %13 : vector<1xf32> to vector<1x1x1xf32>
    %15 = vector.extract %14[0, 0, 0] : f32 from vector<1x1x1xf32>
    %16 = arith.divf %15, %11 : f32
    %c0_5 = arith.constant 0 : index
    %17 = memref.load %arg2[%c0_5] : memref<1xf32, #tpu.memory_space<smem>>
    memref.store %16, %arg2[%c0_5] : memref<1xf32, #tpu.memory_space<smem>>
    return
  }
}

</mosaic_0001>

<llo_original>
// kernel: tpu_custom_call.1
$region0: #{tpu_custom_call.1}
  #allocation0 [shape = 'u32[]', space=smem, size = 0x4, offset = 0x4, fixed_abs, tag = 'smem constant byte address 0x4 - core index']
  #allocation1 [shape = 'u32[144,128]{1,0:T(1,128)}', space=vmem, size = 0x12000, scoped, tag = 'internal scratch']
  %s0 = inlined_call_operand.hbm [shape: f32[1,8], index: 0, kind: input, shape index: {}]
  %s1 = inlined_call_operand.vmem [shape: f32[1,8], index: 1, kind: input, shape index: {}]
  %s2 = inlined_call_operand.hbm [shape: f32[1], index: 2, kind: output, shape index: {}]
  %s3 = sld [smem:[#allocation0]]
  $region22: #{tpu_custom_call.1} parent=0
    _
  %s5 = ssub.s32 1, %s3
  %s6 = scalar_select 0, %s5, %s3
  $region1: #{tpu_custom_call.1} parent=0
    #allocation2 [shape = 'u8[512]{0}', space=vmem, size = 0x400, scoped, tag = 'input window, operand 0, single buffered']
    #allocation3 [shape = 's32[1]{0}', space=sflag, size = 0x4, scoped, tag = 'scoped memory for tpu_custom_call.1']
    #allocation4 [shape = 's32[1]{0}', space=sflag, size = 0x4, scoped, tag = 'scoped memory for tpu_custom_call.1']
    #allocation5 [shape = 'u8[512]{0}', space=smem, size = 0x200, scoped, tag = 'output window, operand 0, single buffered']
    %7 = vsyncpa [#allocation3], 0
    %8 = vsyncpa [#allocation4], 0
    // Predicated region
    $region2: #{tpu_custom_call.1} parent=1 // pred_check
      _
    $region3: #{tpu_custom_call.1} parent=1 // pred_check_branch
      %10 = sbr.rel (0) target = $region5
    $region4: #{tpu_custom_call.1} parent=1 // pred_region
      %s12 = ssub.s32 16, 16
      %13 = vsyncadd [#allocation3], %s12
      %s15 = sshll.u32 [#allocation2], 4
      %s16 = int_to_ptr.vmem [resolvable:$true] %s15
      %18 = dma.hbm_to_vmem [thread:$0]  %s0, 16, %s16, [#allocation3]
    $region5: #{tpu_custom_call.1} parent=1 // pred_fallthru
      _
    // Predicated region
    $region6: #{tpu_custom_call.1} parent=1 // pred_check
      _
    $region7: #{tpu_custom_call.1} parent=1 // pred_check_branch
      %20 = sbr.rel (0) target = $region9
    $region8: #{tpu_custom_call.1} parent=1 // pred_region
      _
    $region9: #{tpu_custom_call.1} parent=1 // pred_fallthru
      _
    // Predicated region
    $region10: #{tpu_custom_call.1} parent=1 // pred_check
      _
    $region11: #{tpu_custom_call.1} parent=1 // pred_check_branch
      %22 = sbr.rel (0) target = $region13
    $region12: #{tpu_custom_call.1} parent=1 // pred_region
      %23 = dma.done [#allocation3], 16
    $region13: #{tpu_custom_call.1} parent=1 // pred_fallthru
      _
    %v24 = vld [vmem:[#allocation2] sm:$0x1]
    %v25 = vld [vmem:[%s1] sm:$0x1]
    %v26 = vmul.f32 %v25, 0.1
    %v27 = vmul.f32 %v26, 1.442695
    %v28 = vpow.pop %v27
    %v29 = vsub.f32 %v24, %v25
    %v30 = vmul.f32 %v29, %v29
    %v31 = vmul.f32 %v28, %v30
    %vm32 = vcmask 57344
    %v33 = vsel %vm32, %v28, 0.0
    %34 = vadd.xlane.f32.xlu0 %v33
    %v35 = vpop.xlane.xlu0 %34
    %v36 = vrot.slane %v35, 4
    %v37 = vadd.f32 %v35, %v36
    %v38 = vrot.slane %v37, 2
    %v39 = vadd.f32 %v37, %v38
    %v40 = vrot.slane %v39, 1
    %v41 = vadd.f32 %v39, %v40
    %s42 = vtos %v41
    %v43 = vsel %vm32, %v31, 0.0
    %44 = vadd.xlane.f32.xlu0 %v43
    %v45 = vpop.xlane.xlu0 %44
    %v46 = vrot.slane %v45, 4
    %v47 = vadd.f32 %v45, %v46
    %v48 = vrot.slane %v47, 2
    %v49 = vadd.f32 %v47, %v48
    %v50 = vrot.slane %v49, 1
    %v51 = vadd.f32 %v49, %v50
    %s52 = vtos %v51
    %v53 = vstv %s42
    %v54 = vrcp.pop %v53
    %s55 = vtos %v54
    %s56 = smul.f32 %s52, %s55
    %s57 = scalar_lea.smem [#allocation5], 0
    %58 = sst [smem:[%s57]] %s56
    // Predicated region
    $region14: #{tpu_custom_call.1} parent=1 // pred_check
      _
    $region15: #{tpu_custom_call.1} parent=1 // pred_check_branch
      %60 = sbr.rel (0) target = $region17
    $region16: #{tpu_custom_call.1} parent=1 // pred_region
      %s62 = ssub.s32 16, 16
      %63 = vsyncadd [#allocation4], %s62
      %66 = dma.smem_to_hbm [#allocation5], 16, %s2, [#allocation4]
    $region17: #{tpu_custom_call.1} parent=1 // pred_fallthru
      _
    // Predicated region
    $region18: #{tpu_custom_call.1} parent=1 // pred_check
      _
    $region19: #{tpu_custom_call.1} parent=1 // pred_check_branch
      %68 = sbr.rel (0) target = $region21
    $region20: #{tpu_custom_call.1} parent=1 // pred_region
      %69 = dma.done [#allocation4], 16
    $region21: #{tpu_custom_call.1} parent=1 // pred_fallthru
      _
    %70 = sfence
    %71 = vsyncpa [#allocation3], 1
    %72 = vsyncpa [#allocation4], 1

</llo_original>
